<compile_context>
chip_gen: v5e
topology: v5e:2x2
jax: 0.10.0
libtpu: 0.0.40
codegen_flags: <defaults>
</compile_context>

<pallas_src>
import jax
import jax.numpy as jnp
from jax.experimental import pallas as pl
from jax.experimental.pallas import tpu as pltpu


def _round_up(n, m):
    return ((n + m - 1) // m) * m


def mlp_kernel(x_ref, w1_ref, b1_ref, w2_ref, b2_ref, o_ref):
    # Layer 1 on the MXU: (H, D_in) . (TB, D_in)^T -> (H, TB); batch on lanes.
    h = jax.lax.dot_general(
        w1_ref[...], x_ref[...],
        dimension_numbers=(((1,), (1,)), ((), ())),
        preferred_element_type=jnp.float32,
        precision=jax.lax.Precision.HIGHEST,
    )
    h = jnp.maximum(h + b1_ref[...], 0.0)                 # (H,TB) + (H,1), ReLU
    # Layer 2 (output width 1): VPU multiply + sublane (XLU) reduce, no MXU trip.
    y = jnp.sum(h * w2_ref[...], axis=0, keepdims=True)   # (1, TB)
    y = y + b2_ref[0, 0]                                  # SMEM scalar bias
    o_ref[...] = jax.nn.sigmoid(y)                        # lane-dense store


def neural_net_forward(x, w1, b1, w2, b2):
    """Forward pass. PyTorch layouts: x (B, D_in), w1 (H, D_in), b1 (H,),
    w2 (1, H), b2 (1,). Returns (B, 1) float32."""
    B, D_in = x.shape
    H = w1.shape[0]

    if x.dtype != jnp.float32:
        x = x.astype(jnp.float32)
    w1f = w1.astype(jnp.float32)                 # (H, D_in): resident in VMEM
    b1c = b1.reshape(H, 1).astype(jnp.float32)   # (H, 1): broadcast over lanes
    w2c = w2.reshape(H, 1).astype(jnp.float32)   # (H, 1): broadcast over lanes
    b2s = b2.reshape(1, 1).astype(jnp.float32)   # (1, 1): SMEM scalar

    # --- VMEM budget: ~75% of physical, capped at 100 MiB (≈96 MiB on
    # 128 MiB v5e/v6e, ≈48 MiB on 64 MiB v7x). Fallback is safe everywhere.
    try:
        phys_vmem = int(pltpu.get_tpu_info().vmem_capacity_bytes)
    except Exception:
        phys_vmem = 64 * 1024 * 1024
    vmem_limit = min(int(phys_vmem * 0.75), 100 * 1024 * 1024)

    # --- Batch tile TB (lane axis): as large as the budget allows, capped at
    # 2048, and capped so the batch grid has >= 2 steps when B > 128 (v7x TCs).
    weight_bytes = 2 * (H * D_in + 2 * H) * 4          # double-buffered weights
    per_lane_bytes = 4 * (2 * D_in + 2 + H)            # x bufs + out bufs + h temp
    tb_cap = max(128, (((vmem_limit // 2 - weight_bytes) // per_lane_bytes)
                       // 128) * 128)
    tb_two_steps = _round_up(max(1, -(-B // 2)), 128)  # round_up(cdiv(B,2), 128)
    TB = max(128, min(2048, tb_cap, tb_two_steps))

    B_pad = _round_up(B, 128)                          # lane-dense output width
    grid = (pl.cdiv(B_pad, TB),)                       # ragged last step allowed

    grid_spec = pl.GridSpec(
        grid=grid,
        in_specs=[
            pl.BlockSpec((TB, D_in), lambda i: (i, 0)),     # x: contiguous rows
            pl.BlockSpec((H, D_in), lambda i: (0, 0)),      # w1: VMEM-resident
            pl.BlockSpec((H, 1), lambda i: (0, 0)),         # b1: VMEM-resident
            pl.BlockSpec((H, 1), lambda i: (0, 0)),         # w2: VMEM-resident
            pl.BlockSpec(memory_space=pltpu.MemorySpace.SMEM),  # b2 scalar
        ],
        out_specs=pl.BlockSpec((1, TB), lambda i: (0, i)),  # lane-dense output
    )

    out = pl.pallas_call(
        mlp_kernel,
        out_shape=jax.ShapeDtypeStruct((1, B_pad), jnp.float32),
        grid_spec=grid_spec,
        compiler_params=pltpu.CompilerParams(
            dimension_semantics=("parallel",),
            vmem_limit_bytes=vmem_limit,
        ),
    )(x, w1f, b1c, w2c, b2s)

    return out[0, :B].reshape(B, 1)


def reference_forward(x, w1, b1, w2, b2):
    h = jnp.maximum(x @ w1.T + b1, 0.0)
    return jax.nn.sigmoid(h @ w2.T + b2)


if __name__ == "__main__":
    key = jax.random.PRNGKey(0)
    B, input_size, hidden_size = 8, 16, 32

    kx, k1, kb1, k2, kb2 = jax.random.split(key, 5)
    x = jax.random.normal(kx, (B, input_size), dtype=jnp.float32)

    # PyTorch-convention weights with U(-1/sqrt(fan_in), 1/sqrt(fan_in)) init.
    bound1 = 1.0 / jnp.sqrt(jnp.float32(input_size))
    w1 = jax.random.uniform(k1, (hidden_size, input_size), jnp.float32,
                            -bound1, bound1)
    b1 = jax.random.uniform(kb1, (hidden_size,), jnp.float32, -bound1, bound1)
    bound2 = 1.0 / jnp.sqrt(jnp.float32(hidden_size))
    w2 = jax.random.uniform(k2, (1, hidden_size), jnp.float32, -bound2, bound2)
    b2 = jax.random.uniform(kb2, (1,), jnp.float32, -bound2, bound2)

    out = jax.block_until_ready(neural_net_forward(x, w1, b1, w2, b2))
    ref = reference_forward(x, w1, b1, w2, b2)

    assert out.shape == (B, 1)
    assert jnp.allclose(out, ref, atol=1e-5, rtol=1e-5)
    print("KERNEL_OK")
</pallas_src>

<mosaic_0001>
module attributes {stable_mosaic.version = 11 : i64} {
  func.func @mlp_kernel(%arg0: i32, %arg1: memref<128x16xf32, #tpu.memory_space<vmem>>, %arg2: memref<32x16xf32, #tpu.memory_space<vmem>>, %arg3: memref<32x1xf32, #tpu.memory_space<vmem>>, %arg4: memref<32x1xf32, #tpu.memory_space<vmem>>, %arg5: memref<1x1xf32, #tpu.memory_space<smem>>, %arg6: memref<1x128xf32, #tpu.memory_space<vmem>>) attributes {dimension_semantics = [#tpu.dimension_semantics<parallel>], iteration_bounds = array<i64: 1>, scalar_prefetch = 0 : i64, scratch_operands = 0 : i64, tpu.core_type = #tpu.core_type<tc>, window_params = [{transform_indices = @transform_0, window_bounds = array<i64: 128, 16>}, {pipeline_mode = #tpu.pipeline_mode<synchronous>, transform_indices = @transform_1, window_bounds = array<i64: 32, 16>}, {pipeline_mode = #tpu.pipeline_mode<synchronous>, transform_indices = @transform_2, window_bounds = array<i64: 32, 1>}, {pipeline_mode = #tpu.pipeline_mode<synchronous>, transform_indices = @transform_3, window_bounds = array<i64: 32, 1>}, {transform_indices = @transform_4, window_bounds = array<i64: 1, 1>}, {transform_indices = @transform_5, window_bounds = array<i64: 1, 128>}]} {
    %c0 = arith.constant 0 : index
    %c0_0 = arith.constant 0 : index
    %0 = vector.load %arg2[%c0, %c0_0] : memref<32x16xf32, #tpu.memory_space<vmem>>, vector<32x16xf32>
    %c0_1 = arith.constant 0 : index
    %c0_2 = arith.constant 0 : index
    %1 = vector.load %arg1[%c0_1, %c0_2] : memref<128x16xf32, #tpu.memory_space<vmem>>, vector<128x16xf32>
    %cst = arith.constant dense<0.000000e+00> : vector<32x128xf32>
    %2 = tpu.matmul %0, %1, %cst {dimension_numbers = #tpu.dot_dimension_numbers<[1], [1], [0], [0], [0, 0, 1, 0], [], []>, precision = #tpu.contract_precision<fp32>} : vector<32x16xf32>, vector<128x16xf32>, vector<32x128xf32> -> vector<32x128xf32>
    %c0_3 = arith.constant 0 : index
    %c0_4 = arith.constant 0 : index
    %3 = vector.load %arg3[%c0_3, %c0_4] : memref<32x1xf32, #tpu.memory_space<vmem>>, vector<32x1xf32>
    %4 = vector.broadcast %3 : vector<32x1xf32> to vector<32x128xf32>
    %5 = arith.addf %2, %4 : vector<32x128xf32>
    %cst_5 = arith.constant 0.000000e+00 : f32
    %6 = vector.broadcast %cst_5 : f32 to vector<32x128xf32>
    %7 = arith.maximumf %5, %6 : vector<32x128xf32>
    %c0_6 = arith.constant 0 : index
    %c0_7 = arith.constant 0 : index
    %8 = vector.load %arg4[%c0_6, %c0_7] : memref<32x1xf32, #tpu.memory_space<vmem>>, vector<32x1xf32>
    %9 = vector.broadcast %8 : vector<32x1xf32> to vector<32x128xf32>
    %10 = arith.mulf %7, %9 : vector<32x128xf32>
    %cst_8 = arith.constant dense<0.000000e+00> : vector<128xf32>
    %11 = vector.multi_reduction <add>, %10, %cst_8 [0] : vector<32x128xf32> to vector<128xf32>
    %12 = vector.shape_cast %11 : vector<128xf32> to vector<1x128xf32>
    %c0_9 = arith.constant 0 : index
    %c0_10 = arith.constant 0 : index
    %13 = memref.load %arg5[%c0_9, %c0_10] : memref<1x1xf32, #tpu.memory_space<smem>>
    %14 = vector.broadcast %13 : f32 to vector<1x128xf32>
    %15 = arith.addf %12, %14 : vector<1x128xf32>
    %16 = arith.negf %15 : vector<1x128xf32>
    %17 = math.exp %16 : vector<1x128xf32>
    %cst_11 = arith.constant 1.000000e+00 : f32
    %18 = vector.broadcast %cst_11 : f32 to vector<1x128xf32>
    %19 = arith.addf %18, %17 : vector<1x128xf32>
    %20 = arith.divf %18, %19 : vector<1x128xf32>
    %c0_12 = arith.constant 0 : index
    %c0_13 = arith.constant 0 : index
    %21 = vector.load %arg6[%c0_12, %c0_13] : memref<1x128xf32, #tpu.memory_space<vmem>>, vector<1x128xf32>
    tpu.vector_store %arg6[%c0_12, %c0_13], %20 {strides = array<i32>} : memref<1x128xf32, #tpu.memory_space<vmem>>, vector<1x128xf32>,
    return
  }
  func.func @transform_0(%arg0: i32) -> (i32, i32) {
    %c0_i32 = arith.constant 0 : i32
    %c0_i32_0 = arith.constant 0 : i32
    return %arg0, %c0_i32 : i32, i32
  }
  func.func @transform_1(%arg0: i32) -> (i32, i32) {
    %c0_i32 = arith.constant 0 : i32
    %c0_i32_0 = arith.constant 0 : i32
    %c0_i32_1 = arith.constant 0 : i32
    return %c0_i32, %c0_i32_0 : i32, i32
  }
  func.func @transform_2(%arg0: i32) -> (i32, i32) {
    %c0_i32 = arith.constant 0 : i32
    %c0_i32_0 = arith.constant 0 : i32
    %c0_i32_1 = arith.constant 0 : i32
    return %c0_i32, %c0_i32_0 : i32, i32
  }
  func.func @transform_3(%arg0: i32) -> (i32, i32) {
    %c0_i32 = arith.constant 0 : i32
    %c0_i32_0 = arith.constant 0 : i32
    %c0_i32_1 = arith.constant 0 : i32
    return %c0_i32, %c0_i32_0 : i32, i32
  }
  func.func @transform_4(%arg0: i32) -> (i32, i32) {
    %c0_i32 = arith.constant 0 : i32
    %c0_i32_0 = arith.constant 0 : i32
    %c0_i32_1 = arith.constant 0 : i32
    return %c0_i32, %c0_i32_0 : i32, i32
  }
  func.func @transform_5(%arg0: i32) -> (i32, i32) {
    %c0_i32 = arith.constant 0 : i32
    %c0_i32_0 = arith.constant 0 : i32
    return %c0_i32, %arg0 : i32, i32
  }
}

</mosaic_0001>

<llo_original>
// kernel: tpu_custom_call.1
$region0: #{tpu_custom_call.1}
  #allocation0 [shape = 'u32[]', space=smem, size = 0x4, offset = 0x4, fixed_abs, tag = 'smem constant byte address 0x4 - core index']
  #allocation1 [shape = 'u32[72,128]{1,0:T(1,128)}', space=vmem, size = 0x9000, scoped, tag = 'internal scratch']
  #allocation2 [shape = 'f32[1,1]{1,0:T(1,128)S(6)}', space=smem, size = 0x200, scoped, tag = 'scoped memory for tpu_custom_call.1']
  %s0 = inlined_call_operand.vmem [shape: f32[8,16], index: 0, kind: input, shape index: {}]
  %s1 = inlined_call_operand.vmem [shape: f32[32,16], index: 1, kind: input, shape index: {}]
  %s2 = inlined_call_operand.vmem [shape: f32[32,1], index: 2, kind: input, shape index: {}]
  %s3 = inlined_call_operand.vmem [shape: f32[32,1], index: 3, kind: input, shape index: {}]
  %s4 = inlined_call_operand.<no memory space> [shape: f32[1,1], index: 4, kind: input, shape index: {}]
  %s5 = inlined_call_operand.hbm [shape: f32[1,128], index: 5, kind: output, shape index: {}]
  %s6 = sld [smem:[#allocation0]]
  $region30: #{tpu_custom_call.1} parent=0
    _
  %s8 = ssub.s32 1, %s6
  %s9 = scalar_select 0, %s8, %s6
  %10 = sst [smem:[#allocation2]] %s4
  $region1: #{tpu_custom_call.1} parent=0
    #allocation3 [shape = 'u8[512]{0}', space=vmem, size = 0x400, scoped, tag = 'output window, operand 0, single buffered']
    #allocation4 [shape = 's32[1]{0}', space=sflag, size = 0x4, scoped, tag = 'scoped memory for tpu_custom_call.1']
    %11 = vsyncpa [#allocation4], 0
    // Predicated region
    $region2: #{tpu_custom_call.1} parent=1 // pred_check
      _
    $region3: #{tpu_custom_call.1} parent=1 // pred_check_branch
      %13 = sbr.rel (0) target = $region5
    $region4: #{tpu_custom_call.1} parent=1 // pred_region
      _
    $region5: #{tpu_custom_call.1} parent=1 // pred_fallthru
      _
    // Predicated region
    $region6: #{tpu_custom_call.1} parent=1 // pred_check
      _
    $region7: #{tpu_custom_call.1} parent=1 // pred_check_branch
      %15 = sbr.rel (0) target = $region9
    $region8: #{tpu_custom_call.1} parent=1 // pred_region
      _
    $region9: #{tpu_custom_call.1} parent=1 // pred_fallthru
      _
    // Predicated region
    $region10: #{tpu_custom_call.1} parent=1 // pred_check
      _
    $region11: #{tpu_custom_call.1} parent=1 // pred_check_branch
      %17 = sbr.rel (0) target = $region13
    $region12: #{tpu_custom_call.1} parent=1 // pred_region
      _
    $region13: #{tpu_custom_call.1} parent=1 // pred_fallthru
      _
    // Predicated region
    $region14: #{tpu_custom_call.1} parent=1 // pred_check
      _
    $region15: #{tpu_custom_call.1} parent=1 // pred_check_branch
      %19 = sbr.rel (0) target = $region17
    $region16: #{tpu_custom_call.1} parent=1 // pred_region
      _
    $region17: #{tpu_custom_call.1} parent=1 // pred_fallthru
      _
    // Predicated region
    $region18: #{tpu_custom_call.1} parent=1 // pred_check
      _
    $region19: #{tpu_custom_call.1} parent=1 // pred_check_branch
      %21 = sbr.rel (0) target = $region21
    $region20: #{tpu_custom_call.1} parent=1 // pred_region
      _
    $region21: #{tpu_custom_call.1} parent=1 // pred_fallthru
      _
    %v22 = vld [vmem:[%s1] sm:$0xff]
    %v23 = vld [vmem:[%s1 + $0x8] sm:$0xff]
    %v24 = vld [vmem:[%s1 + $0x10] sm:$0xff]
    %v25 = vld [vmem:[%s1 + $0x18] sm:$0xff]
    %v26 = vld [vmem:[%s0] sm:$0xff]
    %v27 = vld [vmem:[%s0 + $0x8] sm:$0xff]
    %v28 = vld [vmem:[%s0 + $0x10] sm:$0xff]
    %v29 = vld [vmem:[%s0 + $0x18] sm:$0xff]
    %v30 = vld [vmem:[%s0 + $0x20] sm:$0xff]
    %v31 = vld [vmem:[%s0 + $0x28] sm:$0xff]
    %v32 = vld [vmem:[%s0 + $0x30] sm:$0xff]
    %v33 = vld [vmem:[%s0 + $0x38] sm:$0xff]
    %v34 = vld [vmem:[%s0 + $0x40] sm:$0xff]
    %v35 = vld [vmem:[%s0 + $0x48] sm:$0xff]
    %v36 = vld [vmem:[%s0 + $0x50] sm:$0xff]
    %v37 = vld [vmem:[%s0 + $0x58] sm:$0xff]
    %v38 = vld [vmem:[%s0 + $0x60] sm:$0xff]
    %v39 = vld [vmem:[%s0 + $0x68] sm:$0xff]
    %v40 = vld [vmem:[%s0 + $0x70] sm:$0xff]
    %v41 = vld [vmem:[%s0 + $0x78] sm:$0xff]
    %v42 = vld [vmem:[%s2] sm:$0xff]
    %v43 = vld [vmem:[%s2 + $0x8] sm:$0xff]
    %v44 = vld [vmem:[%s2 + $0x10] sm:$0xff]
    %v45 = vld [vmem:[%s2 + $0x18] sm:$0xff]
    %47 = vset.pattern.permute.xlu0 0
    %48 = vperm.xlu0 %47, %v42
    %v49 = vpop.permute.xlu0 %48
    %52 = vset.pattern.permute.xlu0 0
    %53 = vperm.xlu0 %52, %v43
    %v54 = vpop.permute.xlu0 %53
    %57 = vset.pattern.permute.xlu0 0
    %58 = vperm.xlu0 %57, %v44
    %v59 = vpop.permute.xlu0 %58
    %62 = vset.pattern.permute.xlu0 0
    %63 = vperm.xlu0 %62, %v45
    %v64 = vpop.permute.xlu0 %63
    %vm66 = vcmask 130048
    %v68 = vsel %vm66, %v22, 0
    %v71 = vsel %vm66, %v23, 0
    %v74 = vsel %vm66, %v24, 0
    %v77 = vsel %vm66, %v25, 0
    %v80 = vsel %vm66, %v26, 0
    %v83 = vsel %vm66, %v27, 0
    %v86 = vsel %vm66, %v28, 0
    %v89 = vsel %vm66, %v29, 0
    %v92 = vsel %vm66, %v30, 0
    %v95 = vsel %vm66, %v31, 0
    %v98 = vsel %vm66, %v32, 0
    %v101 = vsel %vm66, %v33, 0
    %v104 = vsel %vm66, %v34, 0
    %v107 = vsel %vm66, %v35, 0
    %v110 = vsel %vm66, %v36, 0
    %v113 = vsel %vm66, %v37, 0
    %v116 = vsel %vm66, %v38, 0
    %v119 = vsel %vm66, %v39, 0
    %v122 = vsel %vm66, %v40, 0
    %v125 = vsel %vm66, %v41, 0
    %v127 = vand.u32 %v125, 4294901760
    %128 = vmatpush.xpose.msra.mxu0 %v127
    %v129 = vand.u32 %v122, 4294901760
    %130 = vmatpush.xpose.msra.mxu0 %v129
    %v131 = vand.u32 %v119, 4294901760
    %132 = vmatpush.xpose.msra.mxu0 %v131
    %v133 = vand.u32 %v116, 4294901760
    %134 = vmatpush.xpose.msra.mxu0 %v133
    %v135 = vand.u32 %v113, 4294901760
    %136 = vmatpush.xpose.msra.mxu0 %v135
    %v137 = vand.u32 %v110, 4294901760
    %138 = vmatpush.xpose.msra.mxu0 %v137
    %v139 = vand.u32 %v107, 4294901760
    %140 = vmatpush.xpose.msra.mxu0 %v139
    %v141 = vand.u32 %v104, 4294901760
    %142 = vmatpush.xpose.msra.mxu0 %v141
    %v143 = vand.u32 %v101, 4294901760
    %144 = vmatpush.xpose.msra.mxu0 %v143
    %v145 = vand.u32 %v98, 4294901760
    %146 = vmatpush.xpose.msra.mxu0 %v145
    %v147 = vand.u32 %v95, 4294901760
    %148 = vmatpush.xpose.msra.mxu0 %v147
    %v149 = vand.u32 %v92, 4294901760
    %150 = vmatpush.xpose.msra.mxu0 %v149
    %v151 = vand.u32 %v89, 4294901760
    %152 = vmatpush.xpose.msra.mxu0 %v151
    %v153 = vand.u32 %v86, 4294901760
    %154 = vmatpush.xpose.msra.mxu0 %v153
    %v155 = vand.u32 %v83, 4294901760
    %156 = vmatpush.xpose.msra.mxu0 %v155
    %v157 = vand.u32 %v80, 4294901760
    %158 = vmatpush.xpose.msra.mxu0 %v157
    %v159 = vand.u32 %v68, 4294901760
    %v160 = vsub.f32 %v68, %v159
    %v161 = vand.u32 %v160, 4294901760
    %v162 = vsub.f32 %v160, %v161
    %v163 = vand.u32 %v162, 4294901760
    %164 = vmatmul.f32.gmra.mxu0 %v163
    %v165 = vpop.f32.mrf.mxu0
    %v166 = vadd.f32 %v49, %v165
    %v167 = vand.u32 %v71, 4294901760
    %v168 = vsub.f32 %v71, %v167
    %v169 = vand.u32 %v168, 4294901760
    %v170 = vsub.f32 %v168, %v169
    %v171 = vand.u32 %v170, 4294901760
    %172 = vmatmul.f32.gmra.mxu0 %v171
    %v173 = vpop.f32.mrf.mxu0
    %v174 = vadd.f32 %v54, %v173
    %v175 = vand.u32 %v74, 4294901760
    %v176 = vsub.f32 %v74, %v175
    %v177 = vand.u32 %v176, 4294901760
    %v178 = vsub.f32 %v176, %v177
    %v179 = vand.u32 %v178, 4294901760
    %180 = vmatmul.f32.gmra.mxu0 %v179
    %v181 = vpop.f32.mrf.mxu0
    %v182 = vadd.f32 %v59, %v181
    %v183 = vand.u32 %v77, 4294901760
    %v184 = vsub.f32 %v77, %v183
    %v185 = vand.u32 %v184, 4294901760
    %v186 = vsub.f32 %v184, %v185
    %v187 = vand.u32 %v186, 4294901760
    %188 = vmatmul.f32.gmra.mxu0 %v187
    %v189 = vpop.f32.mrf.mxu0
    %v190 = vadd.f32 %v64, %v189
    %191 = vdwg.mxu0
    %v192 = vand.u32 %v125, 4294901760
    %v193 = vsub.f32 %v125, %v192
    %v194 = vand.u32 %v193, 4294901760
    %v195 = vsub.f32 %v193, %v194
    %v196 = vand.u32 %v195, 4294901760
    %197 = vmatpush.xpose.msra.mxu0 %v196
    %v198 = vand.u32 %v122, 4294901760
    %v199 = vsub.f32 %v122, %v198
    %v200 = vand.u32 %v199, 4294901760
    %v201 = vsub.f32 %v199, %v200
    %v202 = vand.u32 %v201, 4294901760
    %203 = vmatpush.xpose.msra.mxu0 %v202
    %v204 = vand.u32 %v119, 4294901760
    %v205 = vsub.f32 %v119, %v204
    %v206 = vand.u32 %v205, 4294901760
    %v207 = vsub.f32 %v205, %v206
    %v208 = vand.u32 %v207, 4294901760
    %209 = vmatpush.xpose.msra.mxu0 %v208
    %v210 = vand.u32 %v116, 4294901760
    %v211 = vsub.f32 %v116, %v210
    %v212 = vand.u32 %v211, 4294901760
    %v213 = vsub.f32 %v211, %v212
    %v214 = vand.u32 %v213, 4294901760
    %215 = vmatpush.xpose.msra.mxu0 %v214
    %v216 = vand.u32 %v113, 4294901760
    %v217 = vsub.f32 %v113, %v216
    %v218 = vand.u32 %v217, 4294901760
    %v219 = vsub.f32 %v217, %v218
    %v220 = vand.u32 %v219, 4294901760
    %221 = vmatpush.xpose.msra.mxu0 %v220
    %v222 = vand.u32 %v110, 4294901760
    %v223 = vsub.f32 %v110, %v222
    %v224 = vand.u32 %v223, 4294901760
    %v225 = vsub.f32 %v223, %v224
    %v226 = vand.u32 %v225, 4294901760
    %227 = vmatpush.xpose.msra.mxu0 %v226
    %v228 = vand.u32 %v107, 4294901760
    %v229 = vsub.f32 %v107, %v228
    %v230 = vand.u32 %v229, 4294901760
    %v231 = vsub.f32 %v229, %v230
    %v232 = vand.u32 %v231, 4294901760
    %233 = vmatpush.xpose.msra.mxu0 %v232
    %v234 = vand.u32 %v104, 4294901760
    %v235 = vsub.f32 %v104, %v234
    %v236 = vand.u32 %v235, 4294901760
    %v237 = vsub.f32 %v235, %v236
    %v238 = vand.u32 %v237, 4294901760
    %239 = vmatpush.xpose.msra.mxu0 %v238
    %v240 = vand.u32 %v101, 4294901760
    %v241 = vsub.f32 %v101, %v240
    %v242 = vand.u32 %v241, 4294901760
    %v243 = vsub.f32 %v241, %v242
    %v244 = vand.u32 %v243, 4294901760
    %245 = vmatpush.xpose.msra.mxu0 %v244
    %v246 = vand.u32 %v98, 4294901760
    %v247 = vsub.f32 %v98, %v246
    %v248 = vand.u32 %v247, 4294901760
    %v249 = vsub.f32 %v247, %v248
    %v250 = vand.u32 %v249, 4294901760
    %251 = vmatpush.xpose.msra.mxu0 %v250
    %v252 = vand.u32 %v95, 4294901760
    %v253 = vsub.f32 %v95, %v252
    %v254 = vand.u32 %v253, 4294901760
    %v255 = vsub.f32 %v253, %v254
    %v256 = vand.u32 %v255, 4294901760
    %257 = vmatpush.xpose.msra.mxu0 %v256
    %v258 = vand.u32 %v92, 4294901760
    %v259 = vsub.f32 %v92, %v258
    %v260 = vand.u32 %v259, 4294901760
    %v261 = vsub.f32 %v259, %v260
    %v262 = vand.u32 %v261, 4294901760
    %263 = vmatpush.xpose.msra.mxu0 %v262
    %v264 = vand.u32 %v89, 4294901760
    %v265 = vsub.f32 %v89, %v264
    %v266 = vand.u32 %v265, 4294901760
    %v267 = vsub.f32 %v265, %v266
    %v268 = vand.u32 %v267, 4294901760
    %269 = vmatpush.xpose.msra.mxu0 %v268
    %v270 = vand.u32 %v86, 4294901760
    %v271 = vsub.f32 %v86, %v270
    %v272 = vand.u32 %v271, 4294901760
    %v273 = vsub.f32 %v271, %v272
    %v274 = vand.u32 %v273, 4294901760
    %275 = vmatpush.xpose.msra.mxu0 %v274
    %v276 = vand.u32 %v83, 4294901760
    %v277 = vsub.f32 %v83, %v276
    %v278 = vand.u32 %v277, 4294901760
    %v279 = vsub.f32 %v277, %v278
    %v280 = vand.u32 %v279, 4294901760
    %281 = vmatpush.xpose.msra.mxu0 %v280
    %v282 = vand.u32 %v80, 4294901760
    %v283 = vsub.f32 %v80, %v282
    %v284 = vand.u32 %v283, 4294901760
    %v285 = vsub.f32 %v283, %v284
    %v286 = vand.u32 %v285, 4294901760
    %287 = vmatpush.xpose.msra.mxu0 %v286
    %v288 = vand.u32 %v68, 4294901760
    %289 = vmatmul.f32.gmra.mxu0 %v288
    %v290 = vpop.f32.mrf.mxu0
    %v291 = vadd.f32 %v166, %v290
    %v292 = vand.u32 %v71, 4294901760
    %293 = vmatmul.f32.gmra.mxu0 %v292
    %v294 = vpop.f32.mrf.mxu0
    %v295 = vadd.f32 %v174, %v294
    %v296 = vand.u32 %v74, 4294901760
    %297 = vmatmul.f32.gmra.mxu0 %v296
    %v298 = vpop.f32.mrf.mxu0
    %v299 = vadd.f32 %v182, %v298
    %v300 = vand.u32 %v77, 4294901760
    %301 = vmatmul.f32.gmra.mxu0 %v300
    %v302 = vpop.f32.mrf.mxu0
    %v303 = vadd.f32 %v190, %v302
    %304 = vdwg.mxu0
    %v305 = vand.u32 %v125, 4294901760
    %v306 = vsub.f32 %v125, %v305
    %307 = vmatpush.xpose.msra.mxu0 %v306
    %v308 = vand.u32 %v122, 4294901760
    %v309 = vsub.f32 %v122, %v308
    %310 = vmatpush.xpose.msra.mxu0 %v309
    %v311 = vand.u32 %v119, 4294901760
    %v312 = vsub.f32 %v119, %v311
    %313 = vmatpush.xpose.msra.mxu0 %v312
    %v314 = vand.u32 %v116, 4294901760
    %v315 = vsub.f32 %v116, %v314
    %316 = vmatpush.xpose.msra.mxu0 %v315
    %v317 = vand.u32 %v113, 4294901760
    %v318 = vsub.f32 %v113, %v317
    %319 = vmatpush.xpose.msra.mxu0 %v318
    %v320 = vand.u32 %v110, 4294901760
    %v321 = vsub.f32 %v110, %v320
    %322 = vmatpush.xpose.msra.mxu0 %v321
    %v323 = vand.u32 %v107, 4294901760
    %v324 = vsub.f32 %v107, %v323
    %325 = vmatpush.xpose.msra.mxu0 %v324
    %v326 = vand.u32 %v104, 4294901760
    %v327 = vsub.f32 %v104, %v326
    %328 = vmatpush.xpose.msra.mxu0 %v327
    %v329 = vand.u32 %v101, 4294901760
    %v330 = vsub.f32 %v101, %v329
    %331 = vmatpush.xpose.msra.mxu0 %v330
    %v332 = vand.u32 %v98, 4294901760
    %v333 = vsub.f32 %v98, %v332
    %334 = vmatpush.xpose.msra.mxu0 %v333
    %v335 = vand.u32 %v95, 4294901760
    %v336 = vsub.f32 %v95, %v335
    %337 = vmatpush.xpose.msra.mxu0 %v336
    %v338 = vand.u32 %v92, 4294901760
    %v339 = vsub.f32 %v92, %v338
    %340 = vmatpush.xpose.msra.mxu0 %v339
    %v341 = vand.u32 %v89, 4294901760
    %v342 = vsub.f32 %v89, %v341
    %343 = vmatpush.xpose.msra.mxu0 %v342
    %v344 = vand.u32 %v86, 4294901760
    %v345 = vsub.f32 %v86, %v344
    %346 = vmatpush.xpose.msra.mxu0 %v345
    %v347 = vand.u32 %v83, 4294901760
    %v348 = vsub.f32 %v83, %v347
    %349 = vmatpush.xpose.msra.mxu0 %v348
    %v350 = vand.u32 %v80, 4294901760
    %v351 = vsub.f32 %v80, %v350
    %352 = vmatpush.xpose.msra.mxu0 %v351
    %v353 = vand.u32 %v68, 4294901760
    %v354 = vsub.f32 %v68, %v353
    %355 = vmatmul.f32.gmra.mxu0 %v354
    %v356 = vpop.f32.mrf.mxu0
    %v357 = vadd.f32 %v291, %v356
    %v358 = vand.u32 %v71, 4294901760
    %v359 = vsub.f32 %v71, %v358
    %360 = vmatmul.f32.gmra.mxu0 %v359
    %v361 = vpop.f32.mrf.mxu0
    %v362 = vadd.f32 %v295, %v361
    %v363 = vand.u32 %v74, 4294901760
    %v364 = vsub.f32 %v74, %v363
    %365 = vmatmul.f32.gmra.mxu0 %v364
    %v366 = vpop.f32.mrf.mxu0
    %v367 = vadd.f32 %v299, %v366
    %v368 = vand.u32 %v77, 4294901760
    %v369 = vsub.f32 %v77, %v368
    %370 = vmatmul.f32.gmra.mxu0 %v369
    %v371 = vpop.f32.mrf.mxu0
    %v372 = vadd.f32 %v303, %v371
    %373 = vdwg.mxu0
    %v374 = vand.u32 %v125, 4294901760
    %375 = vmatpush.xpose.msra.mxu0 %v374
    %v376 = vand.u32 %v122, 4294901760
    %377 = vmatpush.xpose.msra.mxu0 %v376
    %v378 = vand.u32 %v119, 4294901760
    %379 = vmatpush.xpose.msra.mxu0 %v378
    %v380 = vand.u32 %v116, 4294901760
    %381 = vmatpush.xpose.msra.mxu0 %v380
    %v382 = vand.u32 %v113, 4294901760
    %383 = vmatpush.xpose.msra.mxu0 %v382
    %v384 = vand.u32 %v110, 4294901760
    %385 = vmatpush.xpose.msra.mxu0 %v384
    %v386 = vand.u32 %v107, 4294901760
    %387 = vmatpush.xpose.msra.mxu0 %v386
    %v388 = vand.u32 %v104, 4294901760
    %389 = vmatpush.xpose.msra.mxu0 %v388
    %v390 = vand.u32 %v101, 4294901760
    %391 = vmatpush.xpose.msra.mxu0 %v390
    %v392 = vand.u32 %v98, 4294901760
    %393 = vmatpush.xpose.msra.mxu0 %v392
    %v394 = vand.u32 %v95, 4294901760
    %395 = vmatpush.xpose.msra.mxu0 %v394
    %v396 = vand.u32 %v92, 4294901760
    %397 = vmatpush.xpose.msra.mxu0 %v396
    %v398 = vand.u32 %v89, 4294901760
    %399 = vmatpush.xpose.msra.mxu0 %v398
    %v400 = vand.u32 %v86, 4294901760
    %401 = vmatpush.xpose.msra.mxu0 %v400
    %v402 = vand.u32 %v83, 4294901760
    %403 = vmatpush.xpose.msra.mxu0 %v402
    %v404 = vand.u32 %v80, 4294901760
    %405 = vmatpush.xpose.msra.mxu0 %v404
    %v406 = vand.u32 %v68, 4294901760
    %v407 = vsub.f32 %v68, %v406
    %v408 = vand.u32 %v407, 4294901760
    %409 = vmatmul.f32.gmra.mxu0 %v408
    %v410 = vpop.f32.mrf.mxu0
    %v411 = vadd.f32 %v357, %v410
    %v412 = vand.u32 %v71, 4294901760
    %v413 = vsub.f32 %v71, %v412
    %v414 = vand.u32 %v413, 4294901760
    %415 = vmatmul.f32.gmra.mxu0 %v414
    %v416 = vpop.f32.mrf.mxu0
    %v417 = vadd.f32 %v362, %v416
    %v418 = vand.u32 %v74, 4294901760
    %v419 = vsub.f32 %v74, %v418
    %v420 = vand.u32 %v419, 4294901760
    %421 = vmatmul.f32.gmra.mxu0 %v420
    %v422 = vpop.f32.mrf.mxu0
    %v423 = vadd.f32 %v367, %v422
    %v424 = vand.u32 %v77, 4294901760
    %v425 = vsub.f32 %v77, %v424
    %v426 = vand.u32 %v425, 4294901760
    %427 = vmatmul.f32.gmra.mxu0 %v426
    %v428 = vpop.f32.mrf.mxu0
    %v429 = vadd.f32 %v372, %v428
    %430 = vdwg.mxu0
    %v431 = vand.u32 %v125, 4294901760
    %v432 = vsub.f32 %v125, %v431
    %v433 = vand.u32 %v432, 4294901760
    %434 = vmatpush.xpose.msra.mxu0 %v433
    %v435 = vand.u32 %v122, 4294901760
    %v436 = vsub.f32 %v122, %v435
    %v437 = vand.u32 %v436, 4294901760
    %438 = vmatpush.xpose.msra.mxu0 %v437
    %v439 = vand.u32 %v119, 4294901760
    %v440 = vsub.f32 %v119, %v439
    %v441 = vand.u32 %v440, 4294901760
    %442 = vmatpush.xpose.msra.mxu0 %v441
    %v443 = vand.u32 %v116, 4294901760
    %v444 = vsub.f32 %v116, %v443
    %v445 = vand.u32 %v444, 4294901760
    %446 = vmatpush.xpose.msra.mxu0 %v445
    %v447 = vand.u32 %v113, 4294901760
    %v448 = vsub.f32 %v113, %v447
    %v449 = vand.u32 %v448, 4294901760
    %450 = vmatpush.xpose.msra.mxu0 %v449
    %v451 = vand.u32 %v110, 4294901760
    %v452 = vsub.f32 %v110, %v451
    %v453 = vand.u32 %v452, 4294901760
    %454 = vmatpush.xpose.msra.mxu0 %v453
    %v455 = vand.u32 %v107, 4294901760
    %v456 = vsub.f32 %v107, %v455
    %v457 = vand.u32 %v456, 4294901760
    %458 = vmatpush.xpose.msra.mxu0 %v457
    %v459 = vand.u32 %v104, 4294901760
    %v460 = vsub.f32 %v104, %v459
    %v461 = vand.u32 %v460, 4294901760
    %462 = vmatpush.xpose.msra.mxu0 %v461
    %v463 = vand.u32 %v101, 4294901760
    %v464 = vsub.f32 %v101, %v463
    %v465 = vand.u32 %v464, 4294901760
    %466 = vmatpush.xpose.msra.mxu0 %v465
    %v467 = vand.u32 %v98, 4294901760
    %v468 = vsub.f32 %v98, %v467
    %v469 = vand.u32 %v468, 4294901760
    %470 = vmatpush.xpose.msra.mxu0 %v469
    %v471 = vand.u32 %v95, 4294901760
    %v472 = vsub.f32 %v95, %v471
    %v473 = vand.u32 %v472, 4294901760
    %474 = vmatpush.xpose.msra.mxu0 %v473
    %v475 = vand.u32 %v92, 4294901760
    %v476 = vsub.f32 %v92, %v475
    %v477 = vand.u32 %v476, 4294901760
    %478 = vmatpush.xpose.msra.mxu0 %v477
    %v479 = vand.u32 %v89, 4294901760
    %v480 = vsub.f32 %v89, %v479
    %v481 = vand.u32 %v480, 4294901760
    %482 = vmatpush.xpose.msra.mxu0 %v481
    %v483 = vand.u32 %v86, 4294901760
    %v484 = vsub.f32 %v86, %v483
    %v485 = vand.u32 %v484, 4294901760
    %486 = vmatpush.xpose.msra.mxu0 %v485
    %v487 = vand.u32 %v83, 4294901760
    %v488 = vsub.f32 %v83, %v487
    %v489 = vand.u32 %v488, 4294901760
    %490 = vmatpush.xpose.msra.mxu0 %v489
    %v491 = vand.u32 %v80, 4294901760
    %v492 = vsub.f32 %v80, %v491
    %v493 = vand.u32 %v492, 4294901760
    %494 = vmatpush.xpose.msra.mxu0 %v493
    %v495 = vand.u32 %v68, 4294901760
    %496 = vmatmul.f32.gmra.mxu0 %v495
    %v497 = vpop.f32.mrf.mxu0
    %v498 = vadd.f32 %v411, %v497
    %v499 = vand.u32 %v71, 4294901760
    %500 = vmatmul.f32.gmra.mxu0 %v499
    %v501 = vpop.f32.mrf.mxu0
    %v502 = vadd.f32 %v417, %v501
    %v503 = vand.u32 %v74, 4294901760
    %504 = vmatmul.f32.gmra.mxu0 %v503
    %v505 = vpop.f32.mrf.mxu0
    %v506 = vadd.f32 %v423, %v505
    %v507 = vand.u32 %v77, 4294901760
    %508 = vmatmul.f32.gmra.mxu0 %v507
    %v509 = vpop.f32.mrf.mxu0
    %v510 = vadd.f32 %v429, %v509
    %511 = vdwg.mxu0
    %v512 = vand.u32 %v125, 4294901760
    %513 = vmatpush.xpose.msra.mxu0 %v512
    %v514 = vand.u32 %v122, 4294901760
    %515 = vmatpush.xpose.msra.mxu0 %v514
    %v516 = vand.u32 %v119, 4294901760
    %517 = vmatpush.xpose.msra.mxu0 %v516
    %v518 = vand.u32 %v116, 4294901760
    %519 = vmatpush.xpose.msra.mxu0 %v518
    %v520 = vand.u32 %v113, 4294901760
    %521 = vmatpush.xpose.msra.mxu0 %v520
    %v522 = vand.u32 %v110, 4294901760
    %523 = vmatpush.xpose.msra.mxu0 %v522
    %v524 = vand.u32 %v107, 4294901760
    %525 = vmatpush.xpose.msra.mxu0 %v524
    %v526 = vand.u32 %v104, 4294901760
    %527 = vmatpush.xpose.msra.mxu0 %v526
    %v528 = vand.u32 %v101, 4294901760
    %529 = vmatpush.xpose.msra.mxu0 %v528
    %v530 = vand.u32 %v98, 4294901760
    %531 = vmatpush.xpose.msra.mxu0 %v530
    %v532 = vand.u32 %v95, 4294901760
    %533 = vmatpush.xpose.msra.mxu0 %v532
    %v534 = vand.u32 %v92, 4294901760
    %535 = vmatpush.xpose.msra.mxu0 %v534
    %v536 = vand.u32 %v89, 4294901760
    %537 = vmatpush.xpose.msra.mxu0 %v536
    %v538 = vand.u32 %v86, 4294901760
    %539 = vmatpush.xpose.msra.mxu0 %v538
    %v540 = vand.u32 %v83, 4294901760
    %541 = vmatpush.xpose.msra.mxu0 %v540
    %v542 = vand.u32 %v80, 4294901760
    %543 = vmatpush.xpose.msra.mxu0 %v542
    %v544 = vand.u32 %v68, 4294901760
    %545 = vmatmul.f32.gmra.mxu0 %v544
    %v546 = vpop.f32.mrf.mxu0
    %v547 = vadd.f32 %v498, %v546
    %v548 = vand.u32 %v71, 4294901760
    %549 = vmatmul.f32.gmra.mxu0 %v548
    %v550 = vpop.f32.mrf.mxu0
    %v551 = vadd.f32 %v502, %v550
    %v552 = vand.u32 %v74, 4294901760
    %553 = vmatmul.f32.gmra.mxu0 %v552
    %v554 = vpop.f32.mrf.mxu0
    %v555 = vadd.f32 %v506, %v554
    %v556 = vand.u32 %v77, 4294901760
    %557 = vmatmul.f32.gmra.mxu0 %v556
    %v558 = vpop.f32.mrf.mxu0
    %v559 = vadd.f32 %v510, %v558
    %560 = vdwg.mxu0
    %v561 = vmax.f32 %v547, 0.0
    %v562 = vmax.f32 %v551, 0.0
    %v563 = vmax.f32 %v555, 0.0
    %v564 = vmax.f32 %v559, 0.0
    %v565 = vld [vmem:[%s3] sm:$0xff]
    %v566 = vld [vmem:[%s3 + $0x8] sm:$0xff]
    %v567 = vld [vmem:[%s3 + $0x10] sm:$0xff]
    %v568 = vld [vmem:[%s3 + $0x18] sm:$0xff]
    %570 = vset.pattern.permute.xlu0 0
    %571 = vperm.xlu0 %570, %v565
    %v572 = vpop.permute.xlu0 %571
    %575 = vset.pattern.permute.xlu0 0
    %576 = vperm.xlu0 %575, %v566
    %v577 = vpop.permute.xlu0 %576
    %580 = vset.pattern.permute.xlu0 0
    %581 = vperm.xlu0 %580, %v567
    %v582 = vpop.permute.xlu0 %581
    %585 = vset.pattern.permute.xlu0 0
    %586 = vperm.xlu0 %585, %v568
    %v587 = vpop.permute.xlu0 %586
    %v589 = vmul.f32 %v561, %v572
    %v590 = vmul.f32 %v562, %v577
    %v591 = vmul.f32 %v563, %v582
    %v592 = vmul.f32 %v564, %v587
    %v593 = vadd.f32 %v589, %v590
    %v594 = vadd.f32 %v593, %v591
    %v595 = vadd.f32 %v594, %v592
    %v596 = vrot.slane %v595, 4
    %v597 = vadd.f32 %v595, %v596
    %v598 = vrot.slane %v597, 2
    %v599 = vadd.f32 %v597, %v598
    %v600 = vrot.slane %v599, 1
    %v601 = vadd.f32 %v599, %v600
    %s602 = sld [smem:[#allocation2]]
    %v603 = vstv %s602
    %v604 = vadd.f32 %v601, %v603
    %v605 = vxor.u32 %v604, 2147483648
    %v606 = vmul.f32 %v605, 1.442695
    %v607 = vpow.pop %v606
    %v608 = vadd.f32 %v607, 1.0
    %v609 = vrcp.pop %v608
    %v610 = vmul.f32 %v608, %v609
    %v611 = vsub.f32 1.0, %v610
    %v612 = vmul.f32 %v609, %v611
    %v613 = vadd.f32 %v609, %v612
    %vm614 = vweird.f32 %v608
    %vm615 = vweird.f32 %v609
    %vm616 = vmor %vm614, %vm615
    %v617 = vsel %vm616, %v609, %v613
    %v618 = vand.u32 2147483647, %v608
    %vm619 = vcmp.eq.f32.partialorder %v618, 8.507059e+37
    %v620 = vand.u32 %v608, 2147483648
    %v621 = vor.u32 1.1754944e-38, %v620
    %v622 = vsel %vm619, %v621, %v617
    %v623 = vmul.f32 1.0, %v622
    %624 = vst [vmem:[#allocation3] sm:$0x1] %v623
    // Predicated region
    $region22: #{tpu_custom_call.1} parent=1 // pred_check
      _
    $region23: #{tpu_custom_call.1} parent=1 // pred_check_branch
      %626 = sbr.rel (0) target = $region25
    $region24: #{tpu_custom_call.1} parent=1 // pred_region
      %628 = vsyncadd [#allocation4], 0
      %s630 = sshll.u32 [#allocation3], 4
      %s631 = int_to_ptr.vmem [resolvable:$true] %s630
      %s632 = sshll.u32 %s5, 4
      %s633 = int_to_ptr.hbm [resolvable:$true] %s632
      %635 = dma.vmem_to_hbm [thread:$0]  %s631, 16, %s633, [#allocation4]
    $region25: #{tpu_custom_call.1} parent=1 // pred_fallthru
      _
    // Predicated region
    $region26: #{tpu_custom_call.1} parent=1 // pred_check
      _
    $region27: #{tpu_custom_call.1} parent=1 // pred_check_branch
      %637 = sbr.rel (0) target = $region29
    $region28: #{tpu_custom_call.1} parent=1 // pred_region
      %639 = dma.done [#allocation4], 16
    $region29: #{tpu_custom_call.1} parent=1 // pred_fallthru
      _
    %640 = vsyncpa [#allocation4], 1

</llo_original>
